<compile_context>
chip_gen: v7x
topology: tpu7x:2x2x1
jax: 0.10.0
libtpu: 0.0.40
codegen_flags: <defaults>
</compile_context>

<pallas_src>
import math

import jax
import jax.numpy as jnp
from jax.experimental import pallas as pl
from jax.experimental.pallas import tpu as pltpu


def _round_up(x, m):
    return (x + m - 1) // m * m


def _make_sage_kernel(tile_m, f_pad, in_feat):
    """Kernel factory closing over static tile / padding sizes."""

    def kernel(adj_ref, h_src_ref, h_self_ref, w_ref, b_ref, o_ref, acc_ref):
        k = pl.program_id(1)

        @pl.when(k == 0)
        def _init():
            # Left half of the accumulator: self features (already padded; the
            # extra ones column only ever hits zero weight rows).
            # Right half: running neighbor sum (+ in-degree in the ones column).
            acc_ref[:, :f_pad] = h_self_ref[...]
            acc_ref[:, f_pad:] = jnp.zeros((tile_m, f_pad), jnp.float32)

        adj = adj_ref[...].astype(jnp.float32)          # bf16 {0,1} -> exact f32
        acc_ref[:, f_pad:] += jnp.dot(
            adj, h_src_ref[...], preferred_element_type=jnp.float32)

        @pl.when(k == pl.num_programs(1) - 1)
        def _finalize():
            agg = acc_ref[:, f_pad:]                    # [tile_m, f_pad]
            deg = agg[:, in_feat:in_feat + 1]           # degree came off the MXU
            inv = pl.reciprocal(jnp.maximum(deg, 1.0), approx=True)
            acc_ref[:, f_pad:] = agg * inv              # mean aggregation
            out = jnp.dot(acc_ref[...], w_ref[...],
                          preferred_element_type=jnp.float32) + b_ref[...]
            o_ref[...] = jnp.maximum(out, 0.0)          # ReLU, lane-dense store

    return kernel


def one_conv_sage(adj, h, weight, bias, *, tile_m=128, tile_k=512):
    """adj:    [N, N] 0/1 (adj[v, u] = 1 iff edge u->v)
       h:      [N, in_feat] float32
       weight: [out_feat, 2*in_feat]  (PyTorch nn.Linear layout)
       bias:   [out_feat]
    """
    n, in_feat = h.shape
    out_feat = weight.shape[0]
    assert weight.shape[1] == 2 * in_feat

    # ---- lane-dense padding -------------------------------------------------
    f_pad = _round_up(in_feat + 1, 128)     # +1 lane for the ones/degree column
    o_pad = _round_up(out_feat, 128)
    n_pad = _round_up(n, 128)

    # Clamp tiles so they divide the padded node count (bf16 adj needs the
    # sublane tile to be a multiple of 16; columns a multiple of 128).
    tile_m = min(tile_m, n_pad)
    tile_m = 16 * math.gcd(tile_m // 16, n_pad // 16)
    tile_k = min(tile_k, n_pad)
    tile_k = 128 * math.gcd(tile_k // 128, n_pad // 128)

    # ---- host-side packing --------------------------------------------------
    # Adjacency in bf16 (exact for 0/1): halves the dominant N^2 HBM stream.
    adj_p = jnp.pad(adj.astype(jnp.bfloat16),
                    ((0, n_pad - n), (0, n_pad - n)))
    # Features padded to 128 lanes, with a ones column at index `in_feat` so
    # the in-degree falls out of the aggregation matmul.
    h_p = jnp.pad(h.astype(jnp.float32),
                  ((0, n_pad - n), (0, f_pad - in_feat)))
    h_p = h_p.at[:n, in_feat].set(1.0)
    # Fused [self | neigh] weight; padding rows are zero so the ones/degree
    # column and feature padding contribute nothing.
    w_self = jnp.pad(weight[:, :in_feat].T.astype(jnp.float32),
                     ((0, f_pad - in_feat), (0, o_pad - out_feat)))
    w_neigh = jnp.pad(weight[:, in_feat:].T.astype(jnp.float32),
                      ((0, f_pad - in_feat), (0, o_pad - out_feat)))
    w_cat = jnp.concatenate([w_self, w_neigh], axis=0)        # [2*f_pad, o_pad]
    b_p = jnp.pad(bias.astype(jnp.float32), (0, o_pad - out_feat)).reshape(1, o_pad)

    grid = (n_pad // tile_m, n_pad // tile_k)
    kernel = _make_sage_kernel(tile_m, f_pad, in_feat)

    out_p = pl.pallas_call(
        kernel,
        out_shape=jax.ShapeDtypeStruct((n_pad, o_pad), jnp.float32),
        grid_spec=pltpu.PrefetchScalarGridSpec(
            num_scalar_prefetch=0,
            grid=grid,
            in_specs=[
                pl.BlockSpec((tile_m, tile_k), lambda i, k: (i, k)),    # adj tile
                pl.BlockSpec((tile_k, f_pad), lambda i, k: (k, 0)),     # source feats
                pl.BlockSpec((tile_m, f_pad), lambda i, k: (i, 0)),     # self feats
                pl.BlockSpec((2 * f_pad, o_pad), lambda i, k: (0, 0)),  # fused weight
                pl.BlockSpec((1, o_pad), lambda i, k: (0, 0)),          # bias
            ],
            out_specs=pl.BlockSpec((tile_m, o_pad), lambda i, k: (i, 0)),
            scratch_shapes=[pltpu.VMEM((tile_m, 2 * f_pad), jnp.float32)],
        ),
        compiler_params=pltpu.CompilerParams(
            dimension_semantics=("parallel", "arbitrary"),
            vmem_limit_bytes=32 * 1024 * 1024,   # safe on v5e/v6e/v7x
        ),
    )(adj_p, h_p, h_p, w_cat, b_p)

    return out_p[:n, :out_feat]


def _reference(adj, h, weight, bias):
    deg = jnp.sum(adj, axis=1, keepdims=True)
    h_neigh = (adj @ h) / jnp.maximum(deg, 1.0)
    h_total = jnp.concatenate([h, h_neigh], axis=1)
    return jax.nn.relu(h_total @ weight.T + bias)


if __name__ == "__main__":
    N, IN_FEAT, OUT_FEAT = 200, 32, 48

    key = jax.random.PRNGKey(0)
    k_adj, k_h, k_w, k_b = jax.random.split(key, 4)

    # deterministic random directed graph (dense adjacency); node 5 is isolated
    # to exercise the zero-in-degree path.
    adj = (jax.random.uniform(k_adj, (N, N)) < 0.15).astype(jnp.float32)
    adj = adj.at[5, :].set(0.0)

    h = jax.random.normal(k_h, (N, IN_FEAT), dtype=jnp.float32)

    # nn.Linear(in_feat*2, out_feat) default init: U(-1/sqrt(fan_in), 1/sqrt(fan_in))
    bound = 1.0 / jnp.sqrt(2.0 * IN_FEAT)
    weight = jax.random.uniform(k_w, (OUT_FEAT, 2 * IN_FEAT),
                                minval=-bound, maxval=bound, dtype=jnp.float32)
    bias = jax.random.uniform(k_b, (OUT_FEAT,),
                              minval=-bound, maxval=bound, dtype=jnp.float32)

    # small tiles so the demo exercises both grid axes (grid = (4, 2) here)
    out = one_conv_sage(adj, h, weight, bias, tile_m=64, tile_k=128)
    out = jax.block_until_ready(out)

    ref = _reference(adj, h, weight, bias)
    assert out.shape == (N, OUT_FEAT)
    max_err = float(jnp.max(jnp.abs(out - ref)))
    assert jnp.allclose(out, ref, atol=1e-3, rtol=1e-3), f"max abs err {max_err}"

    print("KERNEL_OK")
</pallas_src>

<mosaic_0001>
module attributes {stable_mosaic.version = 11 : i64} {
  func.func @kernel(%arg0: i32, %arg1: i32, %arg2: memref<64x128xbf16, #tpu.memory_space<vmem>>, %arg3: memref<128x128xf32, #tpu.memory_space<vmem>>, %arg4: memref<64x128xf32, #tpu.memory_space<vmem>>, %arg5: memref<256x128xf32, #tpu.memory_space<vmem>>, %arg6: memref<1x128xf32, #tpu.memory_space<vmem>>, %arg7: memref<64x128xf32, #tpu.memory_space<vmem>>, %arg8: memref<64x256xf32, #tpu.memory_space<vmem>>) attributes {dimension_semantics = [#tpu.dimension_semantics<parallel>, #tpu.dimension_semantics<arbitrary>], iteration_bounds = array<i64: 4, 2>, scalar_prefetch = 0 : i64, scratch_operands = 1 : i64, tpu.core_type = #tpu.core_type<tc>, window_params = [{transform_indices = @transform_0, window_bounds = array<i64: 64, 128>}, {transform_indices = @transform_1, window_bounds = array<i64: 128, 128>}, {transform_indices = @transform_2, window_bounds = array<i64: 64, 128>}, {pipeline_mode = #tpu.pipeline_mode<synchronous>, transform_indices = @transform_3, window_bounds = array<i64: 256, 128>}, {pipeline_mode = #tpu.pipeline_mode<synchronous>, transform_indices = @transform_4, window_bounds = array<i64: 1, 128>}, {transform_indices = @transform_5, window_bounds = array<i64: 64, 128>}]} {
    %c0_i32 = arith.constant 0 : i32
    %0 = arith.cmpi eq, %arg1, %c0_i32 : i32
    %1 = arith.extui %0 : i1 to i32
    %c0_i32_0 = arith.constant 0 : i32
    %2 = arith.cmpi ne, %1, %c0_i32_0 : i32
    scf.if %2 {
      %c0_8 = arith.constant 0 : index
      %c0_9 = arith.constant 0 : index
      %13 = vector.load %arg4[%c0_8, %c0_9] : memref<64x128xf32, #tpu.memory_space<vmem>>, vector<64x128xf32>
      %c0_10 = arith.constant 0 : index
      %c0_11 = arith.constant 0 : index
      %14 = vector.load %arg8[%c0_10, %c0_11] : memref<64x256xf32, #tpu.memory_space<vmem>>, vector<64x128xf32>
      tpu.vector_store %arg8[%c0_10, %c0_11], %13 {strides = array<i32>} : memref<64x256xf32, #tpu.memory_space<vmem>>, vector<64x128xf32>,
      %cst_12 = arith.constant 0.000000e+00 : f32
      %15 = vector.broadcast %cst_12 : f32 to vector<64x128xf32>
      %c0_13 = arith.constant 0 : index
      %c128_14 = arith.constant 128 : index
      %16 = vector.load %arg8[%c0_13, %c128_14] : memref<64x256xf32, #tpu.memory_space<vmem>>, vector<64x128xf32>
      tpu.vector_store %arg8[%c0_13, %c128_14], %15 {strides = array<i32>} : memref<64x256xf32, #tpu.memory_space<vmem>>, vector<64x128xf32>,
    } else {
    }
    %c0 = arith.constant 0 : index
    %c0_1 = arith.constant 0 : index
    %3 = vector.load %arg2[%c0, %c0_1] : memref<64x128xbf16, #tpu.memory_space<vmem>>, vector<64x128xbf16>
    %4 = arith.extf %3 : vector<64x128xbf16> to vector<64x128xf32>
    %c0_2 = arith.constant 0 : index
    %c128 = arith.constant 128 : index
    %5 = vector.load %arg8[%c0_2, %c128] : memref<64x256xf32, #tpu.memory_space<vmem>>, vector<64x128xf32>
    %c0_3 = arith.constant 0 : index
    %c0_4 = arith.constant 0 : index
    %6 = vector.load %arg3[%c0_3, %c0_4] : memref<128x128xf32, #tpu.memory_space<vmem>>, vector<128x128xf32>
    %cst = arith.constant dense<0.000000e+00> : vector<64x128xf32>
    %7 = tpu.matmul %4, %6, %cst {dimension_numbers = #tpu.dot_dimension_numbers<[1], [0], [0], [1], [0, 0, 1, 1], [], []>} : vector<64x128xf32>, vector<128x128xf32>, vector<64x128xf32> -> vector<64x128xf32>
    %8 = arith.addf %5, %7 : vector<64x128xf32>
    %c0_5 = arith.constant 0 : index
    %c128_6 = arith.constant 128 : index
    %9 = vector.load %arg8[%c0_5, %c128_6] : memref<64x256xf32, #tpu.memory_space<vmem>>, vector<64x128xf32>
    tpu.vector_store %arg8[%c0_5, %c128_6], %8 {strides = array<i32>} : memref<64x256xf32, #tpu.memory_space<vmem>>, vector<64x128xf32>,
    %c1_i32 = arith.constant 1 : i32
    %10 = arith.cmpi eq, %arg1, %c1_i32 : i32
    %11 = arith.extui %10 : i1 to i32
    %c0_i32_7 = arith.constant 0 : i32
    %12 = arith.cmpi ne, %11, %c0_i32_7 : i32
    scf.if %12 {
      %c0_8 = arith.constant 0 : index
      %c128_9 = arith.constant 128 : index
      %13 = vector.load %arg8[%c0_8, %c128_9] : memref<64x256xf32, #tpu.memory_space<vmem>>, vector<64x128xf32>
      %14 = vector.extract_strided_slice %13 {offsets = [0, 32], sizes = [64, 1], strides = [1, 1]} : vector<64x128xf32> to vector<64x1xf32>
      %cst_10 = arith.constant 1.000000e+00 : f32
      %15 = vector.broadcast %cst_10 : f32 to vector<64x1xf32>
      %16 = arith.maximumf %14, %15 : vector<64x1xf32>
      %17 = tpu.reciprocal %16 {approx = true} : vector<64x1xf32> -> vector<64x1xf32>
      %18 = vector.broadcast %17 : vector<64x1xf32> to vector<64x128xf32>
      %19 = arith.mulf %13, %18 : vector<64x128xf32>
      %c0_11 = arith.constant 0 : index
      %c128_12 = arith.constant 128 : index
      %20 = vector.load %arg8[%c0_11, %c128_12] : memref<64x256xf32, #tpu.memory_space<vmem>>, vector<64x128xf32>
      tpu.vector_store %arg8[%c0_11, %c128_12], %19 {strides = array<i32>} : memref<64x256xf32, #tpu.memory_space<vmem>>, vector<64x128xf32>,
      %c0_13 = arith.constant 0 : index
      %c0_14 = arith.constant 0 : index
      %21 = vector.load %arg8[%c0_13, %c0_14] : memref<64x256xf32, #tpu.memory_space<vmem>>, vector<64x256xf32>
      %c0_15 = arith.constant 0 : index
      %c0_16 = arith.constant 0 : index
      %22 = vector.load %arg5[%c0_15, %c0_16] : memref<256x128xf32, #tpu.memory_space<vmem>>, vector<256x128xf32>
      %cst_17 = arith.constant dense<0.000000e+00> : vector<64x128xf32>
      %23 = tpu.matmul %21, %22, %cst_17 {dimension_numbers = #tpu.dot_dimension_numbers<[1], [0], [0], [1], [0, 0, 1, 1], [], []>} : vector<64x256xf32>, vector<256x128xf32>, vector<64x128xf32> -> vector<64x128xf32>
      %c0_18 = arith.constant 0 : index
      %c0_19 = arith.constant 0 : index
      %24 = vector.load %arg6[%c0_18, %c0_19] : memref<1x128xf32, #tpu.memory_space<vmem>>, vector<1x128xf32>
      %25 = vector.broadcast %24 : vector<1x128xf32> to vector<64x128xf32>
      %26 = arith.addf %23, %25 : vector<64x128xf32>
      %cst_20 = arith.constant 0.000000e+00 : f32
      %27 = vector.broadcast %cst_20 : f32 to vector<64x128xf32>
      %28 = arith.maximumf %26, %27 : vector<64x128xf32>
      %c0_21 = arith.constant 0 : index
      %c0_22 = arith.constant 0 : index
      %29 = vector.load %arg7[%c0_21, %c0_22] : memref<64x128xf32, #tpu.memory_space<vmem>>, vector<64x128xf32>
      tpu.vector_store %arg7[%c0_21, %c0_22], %28 {strides = array<i32>} : memref<64x128xf32, #tpu.memory_space<vmem>>, vector<64x128xf32>,
    } else {
    }
    return
  }
  func.func @transform_0(%arg0: i32, %arg1: i32) -> (i32, i32) {
    %c0_i32 = arith.constant 0 : i32
    return %arg0, %arg1 : i32, i32
  }
  func.func @transform_1(%arg0: i32, %arg1: i32) -> (i32, i32) {
    %c0_i32 = arith.constant 0 : i32
    %c0_i32_0 = arith.constant 0 : i32
    return %arg1, %c0_i32 : i32, i32
  }
  func.func @transform_2(%arg0: i32, %arg1: i32) -> (i32, i32) {
    %c0_i32 = arith.constant 0 : i32
    %c0_i32_0 = arith.constant 0 : i32
    return %arg0, %c0_i32 : i32, i32
  }
  func.func @transform_3(%arg0: i32, %arg1: i32) -> (i32, i32) {
    %c0_i32 = arith.constant 0 : i32
    %c0_i32_0 = arith.constant 0 : i32
    %c0_i32_1 = arith.constant 0 : i32
    return %c0_i32, %c0_i32_0 : i32, i32
  }
  func.func @transform_4(%arg0: i32, %arg1: i32) -> (i32, i32) {
    %c0_i32 = arith.constant 0 : i32
    %c0_i32_0 = arith.constant 0 : i32
    %c0_i32_1 = arith.constant 0 : i32
    return %c0_i32, %c0_i32_0 : i32, i32
  }
  func.func @transform_5(%arg0: i32, %arg1: i32) -> (i32, i32) {
    %c0_i32 = arith.constant 0 : i32
    %c0_i32_0 = arith.constant 0 : i32
    return %arg0, %c0_i32 : i32, i32
  }
}

</mosaic_0001>

<llo_original>
// kernel: tpu_custom_call.1
$region0: #{tpu_custom_call.1}
  #allocation0 [shape = 'u32[]', space=smem, size = 0x4, offset = 0x4, fixed_abs, tag = 'smem constant byte address 0x4 - core index']
  #allocation1 [shape = 'u32[144,128]{1,0:T(1,128)}', space=vmem, size = 0x12000, scoped, tag = 'internal scratch']
  #allocation2 [shape = 'f32[64,256]{1,0:T(8,128)}', space=vmem, size = 0x10000, scoped, tag = 'scratch operand']
  %s0 = inlined_call_operand.hbm [shape: bf16[256,256], index: 0, kind: input, shape index: {}]
  %s1 = inlined_call_operand.hbm [shape: f32[256,128], index: 1, kind: input, shape index: {}]
  %s2 = inlined_call_operand.hbm [shape: f32[256,128], index: 2, kind: input, shape index: {}]
  %s3 = inlined_call_operand.hbm [shape: f32[256,128], index: 3, kind: input, shape index: {}]
  %s4 = inlined_call_operand.vmem [shape: f32[1,128], index: 4, kind: input, shape index: {}]
  %s5 = inlined_call_operand.hbm [shape: f32[256,128], index: 5, kind: output, shape index: {}]
  %s6 = sld [smem:[#allocation0]]
  $region77: #{tpu_custom_call.1} parent=0
    _
  %s8 = ssub.s32 1, %s6
  %s9 = scalar_select 0, %s8, %s6
  $region1: #{tpu_custom_call.1} parent=0
    #allocation3 [shape = 'u8[32768]{0}', space=vmem, size = 0x8000, scoped, tag = 'input window, operand 0']
    #allocation4 [shape = 's32[2]{0}', space=sflag, size = 0x8, scoped, tag = 'scoped memory for tpu_custom_call.1']
    #allocation5 [shape = 's32[2]{0}', space=sflag, size = 0x8, scoped, tag = 'scoped memory for tpu_custom_call.1']
    #allocation6 [shape = 'u8[131072]{0}', space=vmem, size = 0x20000, scoped, tag = 'input window, operand 1']
    #allocation7 [shape = 's32[2]{0}', space=sflag, size = 0x8, scoped, tag = 'scoped memory for tpu_custom_call.1']
    #allocation8 [shape = 'u8[65536]{0}', space=vmem, size = 0x10000, scoped, tag = 'input window, operand 2']
    #allocation9 [shape = 'u8[131072]{0}', space=vmem, size = 0x20000, scoped, tag = 'input window, operand 3, single buffered']
    #allocation10 [shape = 's32[1]{0}', space=sflag, size = 0x4, scoped, tag = 'scoped memory for tpu_custom_call.1']
    #allocation11 [shape = 'u8[65536]{0}', space=vmem, size = 0x10000, scoped, tag = 'output window, operand 0']
    %10 = vsyncpa [#allocation4], 0
    %s11 = scalar_lea.sflag [#allocation4], 1
    %12 = vsyncpa %s11, 0
    %13 = vsyncpa [#allocation7], 0
    %s14 = scalar_lea.sflag [#allocation7], 1
    %15 = vsyncpa %s14, 0
    %16 = vsyncpa [#allocation10], 0
    %17 = vsyncpa [#allocation5], 0
    %s18 = scalar_lea.sflag [#allocation5], 1
    %19 = vsyncpa %s18, 0
    loop: start=0, step=1, limit=10
    $region2: #{tpu_custom_call.1} parent=1 // loop_pre_header
      _
    $region3: #{tpu_custom_call.1} parent=1 // loop_header
      %s21 = sphi 0, %s25
      %p22 = scmp.ge.s32.totalorder %s21, 10
      %s28 = sphi 0, %s40
      %s29 = sphi 0, %s36
      %s30 = sphi 0, %s28
      %s31 = sphi 0, %s29
      %s32 = sphi 0, %s30
      %s33 = sphi 0, %s31
      %s45 = sphi 0, %s47
      %s48 = sphi 0, %s45
      %s49 = sphi 0, %s48
      %s65 = sphi 0, %s49
      %s71 = sphi 0, %s73
      %s74 = sphi 0, %s71
      %s75 = sphi 0, %s74
      %s91 = sphi 0, %s75
      %s97 = sphi 0, %s99
      %s100 = sphi 0, %s97
      %s101 = sphi 0, %s100
      %s117 = sphi 0, %s101
      %s121 = sphi 0, %s121
      %s123 = sphi 0, %s121
      %s124 = sphi 0, %s123
      %s138 = sphi 0, %s124
      %s142 = sphi 0, %s142
      %s144 = sphi 0, %s142
      %s145 = sphi 0, %s144
      %s159 = sphi 0, %s145
      %s165 = sphi 0, %s167
      %s168 = sphi 0, %s165
      %s169 = sphi 0, %s168
      %s185 = sphi 0, %s169
    $region4: #{tpu_custom_call.1} parent=1 // loop_header_branch
      %24 = sbr.rel (%p22) target = $region8
    $region5: #{tpu_custom_call.1} parent=1 // loop_body
      %s26 = ssub.s32 %s21, 1
      %s27 = ssub.s32 %s21, 2
      %s34 = sadd.s32 1, %s29
      %p35 = scmp.ge.s32.totalorder %s34, 2
      %s36 = scalar_select %p35, 0, %s34
      %s37 = sadd.s32 1, %s28
      %s38 = scalar_select %p35, %s37, %s28
      %p39 = scmp.ge.s32.totalorder %s38, 4
      %s40 = scalar_select %p39, 0, %s38
      %s41 = ssub.s32 %s28, %s40
      %s42 = ssub.s32 %s29, %s36
      %s43 = sor.u32 %s41, %s42
      %p44 = scmp.eq.s32.totalorder %s43, 0
      %s46 = sadd.s32 %s45, 1
      %s47 = scalar_select %p44, %s45, %s46
      %p50 = pneg %p44
      %p51 = scmp.eq.s32.totalorder %s21, 7
      %p52 = por %p50, %p51
      %p53 = scmp.ne.s32.totalorder %s45, %s48
      %p54 = scmp.eq.s32.totalorder %s21, 0
      %p55 = por %p53, %p54
      %p56 = scmp.ne.s32.totalorder %s45, %s48
      %p57 = scmp.eq.s32.totalorder %s26, 7
      %p58 = por %p56, %p57
      %p59 = scmp.ne.s32.totalorder %s48, %s49
      %p60 = scmp.eq.s32.totalorder %s26, 0
      %p61 = por %p59, %p60
      %p62 = scmp.ne.s32.totalorder %s48, %s49
      %p63 = scmp.eq.s32.totalorder %s27, 7
      %p64 = por %p62, %p63
      %p66 = scmp.ne.s32.totalorder %s49, %s65
      %p67 = scmp.eq.s32.totalorder %s27, 0
      %p68 = por %p66, %p67
      %s69 = ssub.s32 %s29, %s36
      %p70 = scmp.eq.s32.totalorder %s69, 0
      %s72 = sadd.s32 %s71, 1
      %s73 = scalar_select %p70, %s71, %s72
      %p76 = pneg %p70
      %p77 = scmp.eq.s32.totalorder %s21, 7
      %p78 = por %p76, %p77
      %p79 = scmp.ne.s32.totalorder %s71, %s74
      %p80 = scmp.eq.s32.totalorder %s21, 0
      %p81 = por %p79, %p80
      %p82 = scmp.ne.s32.totalorder %s71, %s74
      %p83 = scmp.eq.s32.totalorder %s26, 7
      %p84 = por %p82, %p83
      %p85 = scmp.ne.s32.totalorder %s74, %s75
      %p86 = scmp.eq.s32.totalorder %s26, 0
      %p87 = por %p85, %p86
      %p88 = scmp.ne.s32.totalorder %s74, %s75
      %p89 = scmp.eq.s32.totalorder %s27, 7
      %p90 = por %p88, %p89
      %p92 = scmp.ne.s32.totalorder %s75, %s91
      %p93 = scmp.eq.s32.totalorder %s27, 0
      %p94 = por %p92, %p93
      %s95 = ssub.s32 %s28, %s40
      %p96 = scmp.eq.s32.totalorder %s95, 0
      %s98 = sadd.s32 %s97, 1
      %s99 = scalar_select %p96, %s97, %s98
      %p102 = pneg %p96
      %p103 = scmp.eq.s32.totalorder %s21, 7
      %p104 = por %p102, %p103
      %p105 = scmp.ne.s32.totalorder %s97, %s100
      %p106 = scmp.eq.s32.totalorder %s21, 0
      %p107 = por %p105, %p106
      %p108 = scmp.ne.s32.totalorder %s97, %s100
      %p109 = scmp.eq.s32.totalorder %s26, 7
      %p110 = por %p108, %p109
      %p111 = scmp.ne.s32.totalorder %s100, %s101
      %p112 = scmp.eq.s32.totalorder %s26, 0
      %p113 = por %p111, %p112
      %p114 = scmp.ne.s32.totalorder %s100, %s101
      %p115 = scmp.eq.s32.totalorder %s27, 7
      %p116 = por %p114, %p115
      %p118 = scmp.ne.s32.totalorder %s101, %s117
      %p119 = scmp.eq.s32.totalorder %s27, 0
      %p120 = por %p118, %p119
      %s122 = sadd.s32 %s121, 1
      %p125 = scmp.eq.s32.totalorder %s21, 7
      %p126 = scmp.ne.s32.totalorder %s121, %s123
      %p127 = scmp.eq.s32.totalorder %s21, 0
      %p128 = por %p126, %p127
      %p129 = scmp.ne.s32.totalorder %s121, %s123
      %p130 = scmp.eq.s32.totalorder %s26, 7
      %p131 = por %p129, %p130
      %p132 = scmp.ne.s32.totalorder %s123, %s124
      %p133 = scmp.eq.s32.totalorder %s26, 0
      %p134 = por %p132, %p133
      %p135 = scmp.ne.s32.totalorder %s123, %s124
      %p136 = scmp.eq.s32.totalorder %s27, 7
      %p137 = por %p135, %p136
      %p139 = scmp.ne.s32.totalorder %s124, %s138
      %p140 = scmp.eq.s32.totalorder %s27, 0
      %p141 = por %p139, %p140
      %s143 = sadd.s32 %s142, 1
      %p146 = scmp.eq.s32.totalorder %s21, 7
      %p147 = scmp.ne.s32.totalorder %s142, %s144
      %p148 = scmp.eq.s32.totalorder %s21, 0
      %p149 = por %p147, %p148
      %p150 = scmp.ne.s32.totalorder %s142, %s144
      %p151 = scmp.eq.s32.totalorder %s26, 7
      %p152 = por %p150, %p151
      %p153 = scmp.ne.s32.totalorder %s144, %s145
      %p154 = scmp.eq.s32.totalorder %s26, 0
      %p155 = por %p153, %p154
      %p156 = scmp.ne.s32.totalorder %s144, %s145
      %p157 = scmp.eq.s32.totalorder %s27, 7
      %p158 = por %p156, %p157
      %p160 = scmp.ne.s32.totalorder %s145, %s159
      %p161 = scmp.eq.s32.totalorder %s27, 0
      %p162 = por %p160, %p161
      %s163 = ssub.s32 %s28, %s40
      %p164 = scmp.eq.s32.totalorder %s163, 0
      %s166 = sadd.s32 %s165, 1
      %s167 = scalar_select %p164, %s165, %s166
      %p170 = pneg %p164
      %p171 = scmp.eq.s32.totalorder %s21, 7
      %p172 = por %p170, %p171
      %p173 = scmp.ne.s32.totalorder %s165, %s168
      %p174 = scmp.eq.s32.totalorder %s21, 0
      %p175 = por %p173, %p174
      %p176 = scmp.ne.s32.totalorder %s165, %s168
      %p177 = scmp.eq.s32.totalorder %s26, 7
      %p178 = por %p176, %p177
      %p179 = scmp.ne.s32.totalorder %s168, %s169
      %p180 = scmp.eq.s32.totalorder %s26, 0
      %p181 = por %p179, %p180
      %p182 = scmp.ne.s32.totalorder %s168, %s169
      %p183 = scmp.eq.s32.totalorder %s27, 7
      %p184 = por %p182, %p183
      %p186 = scmp.ne.s32.totalorder %s169, %s185
      %p187 = scmp.eq.s32.totalorder %s27, 0
      %p188 = por %p186, %p187
      %p189 = scmp.le.s32.totalorder 1, %s21
      %p190 = scmp.lt.s32.totalorder %s21, 9
      %p191 = pnand %p189, %p190
      %p192 = pneg %p191
      // Predicated region
      $region9: #{tpu_custom_call.1} parent=5 // pred_check
        _
      $region10: #{tpu_custom_call.1} parent=5 // pred_check_branch
        %194 = sbr.rel (%p191) target = $region12
      $region11: #{tpu_custom_call.1} parent=5 // pred_region
        %s195 = ssub.s32 %s21, 1
        // Predicated region
        $region13: #{tpu_custom_call.1} parent=11 // pred_check
          %p196 = pneg %p134
        $region14: #{tpu_custom_call.1} parent=11 // pred_check_branch
          %198 = sbr.rel (%p196) target = $region16
        $region15: #{tpu_custom_call.1} parent=11 // pred_region
          %s200 = ssub.s32 4096, 4096
          %201 = vsyncadd [#allocation10], %s200
          %s202 = sshll.u32 [#allocation9], 4
          %s203 = int_to_ptr.vmem [resolvable:$true] %s202
          %208 = dma.hbm_to_vmem [thread:$0]  %s3, 4096, %s203, [#allocation10], 128, 128, 8
        $region16: #{tpu_custom_call.1} parent=11 // pred_fallthru
          _
        // Predicated region
        $region17: #{tpu_custom_call.1} parent=11 // pred_check
          %p209 = pneg %p155
        $region18: #{tpu_custom_call.1} parent=11 // pred_check_branch
          %211 = sbr.rel (%p209) target = $region20
        $region19: #{tpu_custom_call.1} parent=11 // pred_region
          _
        $region20: #{tpu_custom_call.1} parent=11 // pred_fallthru
          _
      $region12: #{tpu_custom_call.1} parent=5 // pred_fallthru
        _
      %p212 = scmp.lt.s32.totalorder %s21, 8
      // Predicated region
      $region21: #{tpu_custom_call.1} parent=5 // pred_check
        %p213 = pneg %p212
      $region22: #{tpu_custom_call.1} parent=5 // pred_check_branch
        %215 = sbr.rel (%p213) target = $region24
      $region23: #{tpu_custom_call.1} parent=5 // pred_region
        // Predicated region
        $region25: #{tpu_custom_call.1} parent=23 // pred_check
          %p216 = pneg %p55
        $region26: #{tpu_custom_call.1} parent=23 // pred_check_branch
          %218 = sbr.rel (%p216) target = $region28
        $region27: #{tpu_custom_call.1} parent=23 // pred_region
          %s219 = sand.u32 %s45, 1
          %s220 = scalar_lea.sflag [#allocation4], %s219
          %s221 = sand.u32 %s45, 1
          %s222 = smul.addr %s221, 32
          %s223 = scalar_lea.vmem [#allocation3], %s222
          %s224 = smul.u32 8, %s28
          %s226 = ssub.s32 512, 512
          %227 = vsyncadd %s220, %s226
          %s228 = smul.addr %s224, 2
          %s229 = sadd.s32 %s29, %s228
          %s230 = smul.addr %s229, 64
          %s231 = scalar_lea.hbm %s0, %s230
          %s232 = sshll.u32 %s223, 4
          %s233 = int_to_ptr.vmem [resolvable:$true] %s232
          %238 = dma.hbm_to_vmem [thread:$0]  %s231, 512, %s233, %s220, 128, 64, 4
        $region28: #{tpu_custom_call.1} parent=23 // pred_fallthru
          _
        // Predicated region
        $region29: #{tpu_custom_call.1} parent=23 // pred_check
          %p239 = pneg %p81
        $region30: #{tpu_custom_call.1} parent=23 // pred_check_branch
          %241 = sbr.rel (%p239) target = $region32
        $region31: #{tpu_custom_call.1} parent=23 // pred_region
          %s242 = sand.u32 %s21, 1
          %s243 = scalar_lea.sflag [#allocation7], %s242
          %s244 = sand.u32 %s71, 1
          %s245 = smul.addr %s244, 128
          %s246 = scalar_lea.vmem [#allocation6], %s245
          %s247 = smul.u32 16, %s29
          %s249 = ssub.s32 2048, 2048
          %250 = vsyncadd %s243, %s249
          %s251 = smul.addr %s247, 128
          %s252 = scalar_lea.hbm %s1, %s251
          %s253 = sshll.u32 %s246, 4
          %s254 = int_to_ptr.vmem [resolvable:$true] %s253
          %259 = dma.hbm_to_vmem [thread:$0]  %s252, 2048, %s254, %s243, 128, 128, 8
        $region32: #{tpu_custom_call.1} parent=23 // pred_fallthru
          _
        // Predicated region
        $region33: #{tpu_custom_call.1} parent=23 // pred_check
          %p260 = pneg %p107
        $region34: #{tpu_custom_call.1} parent=23 // pred_check_branch
          %262 = sbr.rel (%p260) target = $region36
        $region35: #{tpu_custom_call.1} parent=23 // pred_region
          %s263 = sand.u32 %s21, 1
          %s264 = scalar_lea.sflag [#allocation7], %s263
          %s265 = sand.u32 %s97, 1
          %s266 = smul.addr %s265, 64
          %s267 = scalar_lea.vmem [#allocation8], %s266
          %s268 = smul.u32 8, %s28
          %s270 = ssub.s32 1024, 1024
          %271 = vsyncadd %s264, %s270
          %s272 = smul.addr %s268, 128
          %s273 = scalar_lea.hbm %s2, %s272
          %s274 = sshll.u32 %s267, 4
          %s275 = int_to_ptr.vmem [resolvable:$true] %s274
          %280 = dma.hbm_to_vmem [thread:$0]  %s273, 1024, %s275, %s264, 128, 128, 8
        $region36: #{tpu_custom_call.1} parent=23 // pred_fallthru
          _
      $region24: #{tpu_custom_call.1} parent=5 // pred_fallthru
        _
      %p281 = scmp.le.s32.totalorder 1, %s21
      %p282 = scmp.lt.s32.totalorder %s21, 9
      %p283 = pnand %p281, %p282
      %p284 = pneg %p283
      // Predicated region
      $region37: #{tpu_custom_call.1} parent=5 // pred_check
        _
      $region38: #{tpu_custom_call.1} parent=5 // pred_check_branch
        %286 = sbr.rel (%p283) target = $region40
      $region39: #{tpu_custom_call.1} parent=5 // pred_region
        %s287 = ssub.s32 %s21, 1
        %s288 = sand.u32 %s48, 1
        %s289 = scalar_lea.sflag [#allocation4], %s288
        %s290 = sand.u32 %s48, 1
        %s291 = smul.addr %s290, 32
        %s292 = scalar_lea.vmem [#allocation3], %s291
        // Predicated region
        $region41: #{tpu_custom_call.1} parent=39 // pred_check
          %p293 = pneg %p61
        $region42: #{tpu_custom_call.1} parent=39 // pred_check_branch
          %295 = sbr.rel (%p293) target = $region44
        $region43: #{tpu_custom_call.1} parent=39 // pred_region
          %296 = dma.done %s289, 512
        $region44: #{tpu_custom_call.1} parent=39 // pred_fallthru
          _
        %s297 = sand.u32 %s26, 1
        %s298 = scalar_lea.sflag [#allocation7], %s297
        %s299 = sand.u32 %s74, 1
        %s300 = smul.addr %s299, 128
        %s301 = scalar_lea.vmem [#allocation6], %s300
        // Predicated region
        $region45: #{tpu_custom_call.1} parent=39 // pred_check
          %p302 = pneg %p87
        $region46: #{tpu_custom_call.1} parent=39 // pred_check_branch
          %304 = sbr.rel (%p302) target = $region48
        $region47: #{tpu_custom_call.1} parent=39 // pred_region
          %305 = dma.done %s298, 2048
        $region48: #{tpu_custom_call.1} parent=39 // pred_fallthru
          _
        %s306 = sand.u32 %s26, 1
        %s307 = scalar_lea.sflag [#allocation7], %s306
        %s308 = sand.u32 %s100, 1
        %s309 = smul.addr %s308, 64
        %s310 = scalar_lea.vmem [#allocation8], %s309
        // Predicated region
        $region49: #{tpu_custom_call.1} parent=39 // pred_check
          %p311 = pneg %p113
        $region50: #{tpu_custom_call.1} parent=39 // pred_check_branch
          %313 = sbr.rel (%p311) target = $region52
        $region51: #{tpu_custom_call.1} parent=39 // pred_region
          %314 = dma.done %s307, 1024
        $region52: #{tpu_custom_call.1} parent=39 // pred_fallthru
          _
        // Predicated region
        $region53: #{tpu_custom_call.1} parent=39 // pred_check
          %p315 = pneg %p134
        $region54: #{tpu_custom_call.1} parent=39 // pred_check_branch
          %317 = sbr.rel (%p315) target = $region56
        $region55: #{tpu_custom_call.1} parent=39 // pred_region
          %318 = dma.done [#allocation10], 4096
        $region56: #{tpu_custom_call.1} parent=39 // pred_fallthru
          _
        %s319 = sand.u32 %s48, 1
        %s320 = scalar_lea.sflag [#allocation4], %s319
        %s321 = sand.u32 %s48, 1
        %s322 = smul.addr %s321, 32
        %s323 = scalar_lea.vmem [#allocation3], %s322
        %p324 = pneg %p61
        %p325 = pneg %p58
        %s326 = sand.u32 %s26, 1
        %s327 = scalar_lea.sflag [#allocation7], %s326
        %s328 = sand.u32 %s74, 1
        %s329 = smul.addr %s328, 128
        %s330 = scalar_lea.vmem [#allocation6], %s329
        %p331 = pneg %p87
        %p332 = pneg %p84
        %s333 = sand.u32 %s26, 1
        %s334 = scalar_lea.sflag [#allocation7], %s333
        %s335 = sand.u32 %s100, 1
        %s336 = smul.addr %s335, 64
        %s337 = scalar_lea.vmem [#allocation8], %s336
        %p338 = pneg %p113
        %p339 = pneg %p110
        %p340 = pneg %p134
        %p341 = pneg %p131
        %p342 = pneg %p155
        %p343 = pneg %p152
        %p344 = pneg %p181
        %p345 = pneg %p178
        %s346 = sand.u32 %s168, 1
        %s347 = scalar_lea.sflag [#allocation5], %s346
        %s348 = sand.u32 %s168, 1
        %s349 = smul.addr %s348, 64
        %s350 = scalar_lea.vmem [#allocation11], %s349
        %s351 = smul.u32 8, %s30
        %s352 = smul.u32 16, %s31
        %s353 = smul.u32 8, %s30
        %s354 = smul.u32 8, %s30
        %p355 = scmp.eq.s32.totalorder %s31, 0
        // Predicated region
        $region57: #{tpu_custom_call.1} parent=39 // pred_check
          %p356 = pneg %p355
        $region58: #{tpu_custom_call.1} parent=39 // pred_check_branch
          %358 = sbr.rel (%p356) target = $region60
        $region59: #{tpu_custom_call.1} parent=39 // pred_region
          %v359 = vld [vmem:[%s310] sm:$0xff]
          %v360 = vld [vmem:[%s310 + $0x8] sm:$0xff]
          %v361 = vld [vmem:[%s310 + $0x10] sm:$0xff]
          %v362 = vld [vmem:[%s310 + $0x18] sm:$0xff]
          %v363 = vld [vmem:[%s310 + $0x20] sm:$0xff]
          %v364 = vld [vmem:[%s310 + $0x28] sm:$0xff]
          %v365 = vld [vmem:[%s310 + $0x30] sm:$0xff]
          %v366 = vld [vmem:[%s310 + $0x38] sm:$0xff]
          %367 = vst [vmem:[#allocation2] sm:$0xff] %v359
          %368 = vst [vmem:[#allocation2 + $0x10] sm:$0xff] %v360
          %369 = vst [vmem:[#allocation2 + $0x20] sm:$0xff] %v361
          %370 = vst [vmem:[#allocation2 + $0x30] sm:$0xff] %v362
          %371 = vst [vmem:[#allocation2 + $0x40] sm:$0xff] %v363
          %372 = vst [vmem:[#allocation2 + $0x50] sm:$0xff] %v364
          %373 = vst [vmem:[#allocation2 + $0x60] sm:$0xff] %v365
          %374 = vst [vmem:[#allocation2 + $0x70] sm:$0xff] %v366
          %375 = vst [vmem:[#allocation2 + $0x8] sm:$0xff] 0.0
          %376 = vst [vmem:[#allocation2 + $0x18] sm:$0xff] 0.0
          %377 = vst [vmem:[#allocation2 + $0x28] sm:$0xff] 0.0
          %378 = vst [vmem:[#allocation2 + $0x38] sm:$0xff] 0.0
          %379 = vst [vmem:[#allocation2 + $0x48] sm:$0xff] 0.0
          %380 = vst [vmem:[#allocation2 + $0x58] sm:$0xff] 0.0
          %381 = vst [vmem:[#allocation2 + $0x68] sm:$0xff] 0.0
          %382 = vst [vmem:[#allocation2 + $0x78] sm:$0xff] 0.0
        $region60: #{tpu_custom_call.1} parent=39 // pred_fallthru
          _
        %v383 = vld [vmem:[%s292] sm:$0xf]
        %v384 = vld [vmem:[%s292 + $0x4] sm:$0xf]
        %v385 = vld [vmem:[%s292 + $0x8] sm:$0xf]
        %v386 = vld [vmem:[%s292 + $0xc] sm:$0xf]
        %v387 = vld [vmem:[%s292 + $0x10] sm:$0xf]
        %v388 = vld [vmem:[%s292 + $0x14] sm:$0xf]
        %v389 = vld [vmem:[%s292 + $0x18] sm:$0xf]
        %v390 = vld [vmem:[%s292 + $0x1c] sm:$0xf]
        %v391 = vunpack.c.l.bf16 %v383
        %v392 = vunpack.c.l.bf16 %v384
        %v393 = vunpack.c.l.bf16 %v385
        %v394 = vunpack.c.l.bf16 %v386
        %v395 = vunpack.c.l.bf16 %v387
        %v396 = vunpack.c.l.bf16 %v388
        %v397 = vunpack.c.l.bf16 %v389
        %v398 = vunpack.c.l.bf16 %v390
        %v399 = vld [vmem:[#allocation2 + $0x8] sm:$0xff]
        %v400 = vld [vmem:[#allocation2 + $0x18] sm:$0xff]
        %v401 = vld [vmem:[#allocation2 + $0x28] sm:$0xff]
        %v402 = vld [vmem:[#allocation2 + $0x38] sm:$0xff]
        %v403 = vld [vmem:[#allocation2 + $0x48] sm:$0xff]
        %v404 = vld [vmem:[#allocation2 + $0x58] sm:$0xff]
        %v405 = vld [vmem:[#allocation2 + $0x68] sm:$0xff]
        %v406 = vld [vmem:[#allocation2 + $0x78] sm:$0xff]
        %v407 = vld [vmem:[%s301] sm:$0xff]
        %v408 = vld [vmem:[%s301 + $0x8] sm:$0xff]
        %v409 = vld [vmem:[%s301 + $0x10] sm:$0xff]
        %v410 = vld [vmem:[%s301 + $0x18] sm:$0xff]
        %v411 = vld [vmem:[%s301 + $0x20] sm:$0xff]
        %v412 = vld [vmem:[%s301 + $0x28] sm:$0xff]
        %v413 = vld [vmem:[%s301 + $0x30] sm:$0xff]
        %v414 = vld [vmem:[%s301 + $0x38] sm:$0xff]
        %v415 = vld [vmem:[%s301 + $0x40] sm:$0xff]
        %v416 = vld [vmem:[%s301 + $0x48] sm:$0xff]
        %v417 = vld [vmem:[%s301 + $0x50] sm:$0xff]
        %v418 = vld [vmem:[%s301 + $0x58] sm:$0xff]
        %v419 = vld [vmem:[%s301 + $0x60] sm:$0xff]
        %v420 = vld [vmem:[%s301 + $0x68] sm:$0xff]
        %v421 = vld [vmem:[%s301 + $0x70] sm:$0xff]
        %v422 = vld [vmem:[%s301 + $0x78] sm:$0xff]
        %423 = vmatprep.subr.mxu0 0.0
        %424 = vmatpush1.msra.mxu0 %v407
        %425 = vmatprep.subr.mxu0 0.0
        %426 = vmatpush1.msra.mxu0 %v408
        %427 = vmatprep.subr.mxu0 0.0
        %428 = vmatpush1.msra.mxu0 %v409
        %429 = vmatprep.subr.mxu0 0.0
        %430 = vmatpush1.msra.mxu0 %v410
        %431 = vmatprep.subr.mxu0 0.0
        %432 = vmatpush1.msra.mxu0 %v411
        %433 = vmatprep.subr.mxu0 0.0
        %434 = vmatpush1.msra.mxu0 %v412
        %435 = vmatprep.subr.mxu0 0.0
        %436 = vmatpush1.msra.mxu0 %v413
        %437 = vmatprep.subr.mxu0 0.0
        %438 = vmatpush1.msra.mxu0 %v414
        %439 = vmatprep.subr.mxu0 0.0
        %440 = vmatpush1.msra.mxu0 %v415
        %441 = vmatprep.subr.mxu0 0.0
        %442 = vmatpush1.msra.mxu0 %v416
        %443 = vmatprep.subr.mxu0 0.0
        %444 = vmatpush1.msra.mxu0 %v417
        %445 = vmatprep.subr.mxu0 0.0
        %446 = vmatpush1.msra.mxu0 %v418
        %447 = vmatprep.subr.mxu0 0.0
        %448 = vmatpush1.msra.mxu0 %v419
        %449 = vmatprep.subr.mxu0 0.0
        %450 = vmatpush1.msra.mxu0 %v420
        %451 = vmatprep.subr.mxu0 0.0
        %452 = vmatpush1.msra.mxu0 %v421
        %453 = vmatprep.subr.mxu0 0.0
        %454 = vmatpush1.msra.mxu0 %v422
        %455 = vmatprep.subr.mxu0 0.0
        %456 = vmatpush1.msra.mxu0 0.0
        %457 = vmatprep.subr.mxu0 0.0
        %458 = vmatpush1.msra.mxu0 0.0
        %459 = vmatprep.subr.mxu0 0.0
        %460 = vmatpush1.msra.mxu0 0.0
        %461 = vmatprep.subr.mxu0 0.0
        %462 = vmatpush1.msra.mxu0 0.0
        %463 = vmatprep.subr.mxu0 0.0
        %464 = vmatpush1.msra.mxu0 0.0
        %465 = vmatprep.subr.mxu0 0.0
        %466 = vmatpush1.msra.mxu0 0.0
        %467 = vmatprep.subr.mxu0 0.0
        %468 = vmatpush1.msra.mxu0 0.0
        %469 = vmatprep.subr.mxu0 0.0
        %470 = vmatpush1.msra.mxu0 0.0
        %471 = vmatprep.subr.mxu0 0.0
        %472 = vmatpush1.msra.mxu0 0.0
        %473 = vmatprep.subr.mxu0 0.0
        %474 = vmatpush1.msra.mxu0 0.0
        %475 = vmatprep.subr.mxu0 0.0
        %476 = vmatpush1.msra.mxu0 0.0
        %477 = vmatprep.subr.mxu0 0.0
        %478 = vmatpush1.msra.mxu0 0.0
        %479 = vmatprep.subr.mxu0 0.0
        %480 = vmatpush1.msra.mxu0 0.0
        %481 = vmatprep.subr.mxu0 0.0
        %482 = vmatpush1.msra.mxu0 0.0
        %483 = vmatprep.subr.mxu0 0.0
        %484 = vmatpush1.msra.mxu0 0.0
        %485 = vmatprep.subr.mxu0 0.0
        %486 = vmatpush1.msra.mxu0 0.0
        %487 = vmatprep.mubr.f32.mxu0 0.0
        %488 = vmatmul.mubr.f32.gmra.mrb[0].mxu0 %v391
        %v489 = vpop.f32.mrb[0].mxu0
        %v490 = vadd.f32 0.0, %v489
        %v491 = vpop.f32.mrb[0].mxu0
        %492 = vmatprep.mubr.f32.mxu0 0.0
        %493 = vmatmul.mubr.f32.gmra.mrb[0].mxu0 %v392
        %v494 = vpop.f32.mrb[0].mxu0
        %v495 = vadd.f32 0.0, %v494
        %v496 = vpop.f32.mrb[0].mxu0
        %497 = vmatprep.mubr.f32.mxu0 0.0
        %498 = vmatmul.mubr.f32.gmra.mrb[0].mxu0 %v393
        %v499 = vpop.f32.mrb[0].mxu0
        %v500 = vadd.f32 0.0, %v499
        %v501 = vpop.f32.mrb[0].mxu0
        %502 = vmatprep.mubr.f32.mxu0 0.0
        %503 = vmatmul.mubr.f32.gmra.mrb[0].mxu0 %v394
        %v504 = vpop.f32.mrb[0].mxu0
        %v505 = vadd.f32 0.0, %v504
        %v506 = vpop.f32.mrb[0].mxu0
        %507 = vmatprep.mubr.f32.mxu0 0.0
        %508 = vmatmul.mubr.f32.gmra.mrb[0].mxu0 %v395
        %v509 = vpop.f32.mrb[0].mxu0
        %v510 = vadd.f32 0.0, %v509
        %v511 = vpop.f32.mrb[0].mxu0
        %512 = vmatprep.mubr.f32.mxu0 0.0
        %513 = vmatmul.mubr.f32.gmra.mrb[0].mxu0 %v396
        %v514 = vpop.f32.mrb[0].mxu0
        %v515 = vadd.f32 0.0, %v514
        %v516 = vpop.f32.mrb[0].mxu0
        %517 = vmatprep.mubr.f32.mxu0 0.0
        %518 = vmatmul.mubr.f32.gmra.mrb[0].mxu0 %v397
        %v519 = vpop.f32.mrb[0].mxu0
        %v520 = vadd.f32 0.0, %v519
        %v521 = vpop.f32.mrb[0].mxu0
        %522 = vmatprep.mubr.f32.mxu0 0.0
        %523 = vmatmul.mubr.f32.gmra.mrb[0].mxu0 %v398
        %v524 = vpop.f32.mrb[0].mxu0
        %v525 = vadd.f32 0.0, %v524
        %v526 = vpop.f32.mrb[0].mxu0
        %527 = vdwg.mxu0
        %v528 = vadd.f32 %v399, %v490
        %v529 = vadd.f32 %v400, %v495
        %v530 = vadd.f32 %v401, %v500
        %v531 = vadd.f32 %v402, %v505
        %v532 = vadd.f32 %v403, %v510
        %v533 = vadd.f32 %v404, %v515
        %v534 = vadd.f32 %v405, %v520
        %v535 = vadd.f32 %v406, %v525
        %536 = vst [vmem:[#allocation2 + $0x8] sm:$0xff] %v528
        %537 = vst [vmem:[#allocation2 + $0x18] sm:$0xff] %v529
        %538 = vst [vmem:[#allocation2 + $0x28] sm:$0xff] %v530
        %539 = vst [vmem:[#allocation2 + $0x38] sm:$0xff] %v531
        %540 = vst [vmem:[#allocation2 + $0x48] sm:$0xff] %v532
        %541 = vst [vmem:[#allocation2 + $0x58] sm:$0xff] %v533
        %542 = vst [vmem:[#allocation2 + $0x68] sm:$0xff] %v534
        %543 = vst [vmem:[#allocation2 + $0x78] sm:$0xff] %v535
        %p544 = scmp.eq.s32.totalorder %s31, 1
        // Predicated region
        $region61: #{tpu_custom_call.1} parent=39 // pred_check
          %p545 = pneg %p544
        $region62: #{tpu_custom_call.1} parent=39 // pred_check_branch
          %547 = sbr.rel (%p545) target = $region64
        $region63: #{tpu_custom_call.1} parent=39 // pred_region
          %v548 = vld [vmem:[#allocation2 + $0x8] sm:$0xff]
          %v549 = vld [vmem:[#allocation2 + $0x18] sm:$0xff]
          %v550 = vld [vmem:[#allocation2 + $0x28] sm:$0xff]
          %v551 = vld [vmem:[#allocation2 + $0x38] sm:$0xff]
          %v552 = vld [vmem:[#allocation2 + $0x48] sm:$0xff]
          %v553 = vld [vmem:[#allocation2 + $0x58] sm:$0xff]
          %v554 = vld [vmem:[#allocation2 + $0x68] sm:$0xff]
          %v555 = vld [vmem:[#allocation2 + $0x78] sm:$0xff]
          %v556 = vmax.f32 %v548, 1.0
          %v557 = vmax.f32 %v549, 1.0
          %v558 = vmax.f32 %v550, 1.0
          %v559 = vmax.f32 %v551, 1.0
          %v560 = vmax.f32 %v552, 1.0
          %v561 = vmax.f32 %v553, 1.0
          %v562 = vmax.f32 %v554, 1.0
          %v563 = vmax.f32 %v555, 1.0
          %v564 = vrcp.pop %v556
          %v565 = vrcp.pop %v557
          %v566 = vrcp.pop %v558
          %v567 = vrcp.pop %v559
          %v568 = vrcp.pop %v560
          %v569 = vrcp.pop %v561
          %v570 = vrcp.pop %v562
          %v571 = vrcp.pop %v563
          %573 = vset.pattern.permute.xlu0 32
          %574 = vperm.xlu0 %573, %v564
          %v575 = vpop.permute.xlu0 %574
          %578 = vset.pattern.permute.xlu0 32
          %579 = vperm.xlu0 %578, %v565
          %v580 = vpop.permute.xlu0 %579
          %583 = vset.pattern.permute.xlu0 32
          %584 = vperm.xlu0 %583, %v566
          %v585 = vpop.permute.xlu0 %584
          %588 = vset.pattern.permute.xlu0 32
          %589 = vperm.xlu0 %588, %v567
          %v590 = vpop.permute.xlu0 %589
          %593 = vset.pattern.permute.xlu0 32
          %594 = vperm.xlu0 %593, %v568
          %v595 = vpop.permute.xlu0 %594
          %598 = vset.pattern.permute.xlu0 32
          %599 = vperm.xlu0 %598, %v569
          %v600 = vpop.permute.xlu0 %599
          %603 = vset.pattern.permute.xlu0 32
          %604 = vperm.xlu0 %603, %v570
          %v605 = vpop.permute.xlu0 %604
          %608 = vset.pattern.permute.xlu0 32
          %609 = vperm.xlu0 %608, %v571
          %v610 = vpop.permute.xlu0 %609
          %v612 = vmul.f32 %v548, %v575
          %v613 = vmul.f32 %v549, %v580
          %v614 = vmul.f32 %v550, %v585
          %v615 = vmul.f32 %v551, %v590
          %v616 = vmul.f32 %v552, %v595
          %v617 = vmul.f32 %v553, %v600
          %v618 = vmul.f32 %v554, %v605
          %v619 = vmul.f32 %v555, %v610
          %620 = vst [vmem:[#allocation2 + $0x8] sm:$0xff] %v612
          %621 = vst [vmem:[#allocation2 + $0x18] sm:$0xff] %v613
          %622 = vst [vmem:[#allocation2 + $0x28] sm:$0xff] %v614
          %623 = vst [vmem:[#allocation2 + $0x38] sm:$0xff] %v615
          %624 = vst [vmem:[#allocation2 + $0x48] sm:$0xff] %v616
          %625 = vst [vmem:[#allocation2 + $0x58] sm:$0xff] %v617
          %626 = vst [vmem:[#allocation2 + $0x68] sm:$0xff] %v618
          %627 = vst [vmem:[#allocation2 + $0x78] sm:$0xff] %v619
          %v628 = vld [vmem:[#allocation2] sm:$0xff]
          %v629 = vld [vmem:[#allocation2 + $0x8] sm:$0xff]
          %v630 = vld [vmem:[#allocation2 + $0x10] sm:$0xff]
          %v631 = vld [vmem:[#allocation2 + $0x18] sm:$0xff]
          %v632 = vld [vmem:[#allocation2 + $0x20] sm:$0xff]
          %v633 = vld [vmem:[#allocation2 + $0x28] sm:$0xff]
          %v634 = vld [vmem:[#allocation2 + $0x30] sm:$0xff]
          %v635 = vld [vmem:[#allocation2 + $0x38] sm:$0xff]
          %v636 = vld [vmem:[#allocation2 + $0x40] sm:$0xff]
          %v637 = vld [vmem:[#allocation2 + $0x48] sm:$0xff]
          %v638 = vld [vmem:[#allocation2 + $0x50] sm:$0xff]
          %v639 = vld [vmem:[#allocation2 + $0x58] sm:$0xff]
          %v640 = vld [vmem:[#allocation2 + $0x60] sm:$0xff]
          %v641 = vld [vmem:[#allocation2 + $0x68] sm:$0xff]
          %v642 = vld [vmem:[#allocation2 + $0x70] sm:$0xff]
          %v643 = vld [vmem:[#allocation2 + $0x78] sm:$0xff]
          %v644 = vld [vmem:[#allocation9] sm:$0xff]
          %v645 = vld [vmem:[#allocation9 + $0x8] sm:$0xff]
          %v646 = vld [vmem:[#allocation9 + $0x10] sm:$0xff]
          %v647 = vld [vmem:[#allocation9 + $0x18] sm:$0xff]
          %v648 = vld [vmem:[#allocation9 + $0x20] sm:$0xff]
          %v649 = vld [vmem:[#allocation9 + $0x28] sm:$0xff]
          %v650 = vld [vmem:[#allocation9 + $0x30] sm:$0xff]
          %v651 = vld [vmem:[#allocation9 + $0x38] sm:$0xff]
          %v652 = vld [vmem:[#allocation9 + $0x40] sm:$0xff]
          %v653 = vld [vmem:[#allocation9 + $0x48] sm:$0xff]
          %v654 = vld [vmem:[#allocation9 + $0x50] sm:$0xff]
          %v655 = vld [vmem:[#allocation9 + $0x58] sm:$0xff]
          %v656 = vld [vmem:[#allocation9 + $0x60] sm:$0xff]
          %v657 = vld [vmem:[#allocation9 + $0x68] sm:$0xff]
          %v658 = vld [vmem:[#allocation9 + $0x70] sm:$0xff]
          %v659 = vld [vmem:[#allocation9 + $0x78] sm:$0xff]
          %v660 = vld [vmem:[#allocation9 + $0x80] sm:$0xff]
          %v661 = vld [vmem:[#allocation9 + $0x88] sm:$0xff]
          %v662 = vld [vmem:[#allocation9 + $0x90] sm:$0xff]
          %v663 = vld [vmem:[#allocation9 + $0x98] sm:$0xff]
          %v664 = vld [vmem:[#allocation9 + $0xa0] sm:$0xff]
          %v665 = vld [vmem:[#allocation9 + $0xa8] sm:$0xff]
          %v666 = vld [vmem:[#allocation9 + $0xb0] sm:$0xff]
          %v667 = vld [vmem:[#allocation9 + $0xb8] sm:$0xff]
          %v668 = vld [vmem:[#allocation9 + $0xc0] sm:$0xff]
          %v669 = vld [vmem:[#allocation9 + $0xc8] sm:$0xff]
          %v670 = vld [vmem:[#allocation9 + $0xd0] sm:$0xff]
          %v671 = vld [vmem:[#allocation9 + $0xd8] sm:$0xff]
          %v672 = vld [vmem:[#allocation9 + $0xe0] sm:$0xff]
          %v673 = vld [vmem:[#allocation9 + $0xe8] sm:$0xff]
          %v674 = vld [vmem:[#allocation9 + $0xf0] sm:$0xff]
          %v675 = vld [vmem:[#allocation9 + $0xf8] sm:$0xff]
          %v676 = vld [vmem:[%s4] sm:$0x1]
          %v678 = vlaneseq
          %v679 = vshrl.u32 %v678, 7
          %v680 = vsub.s32 0, %v679
          %v681 = vrot.slane %v676, %v680
          %683 = vmatprep.subr.mxu0 0.0
          %684 = vmatpush1.msra.mxu0 %v644
          %685 = vmatprep.subr.mxu0 0.0
          %686 = vmatpush1.msra.mxu0 %v645
          %687 = vmatprep.subr.mxu0 0.0
          %688 = vmatpush1.msra.mxu0 %v646
          %689 = vmatprep.subr.mxu0 0.0
          %690 = vmatpush1.msra.mxu0 %v647
          %691 = vmatprep.subr.mxu0 0.0
          %692 = vmatpush1.msra.mxu0 %v648
          %693 = vmatprep.subr.mxu0 0.0
          %694 = vmatpush1.msra.mxu0 %v649
          %695 = vmatprep.subr.mxu0 0.0
          %696 = vmatpush1.msra.mxu0 %v650
          %697 = vmatprep.subr.mxu0 0.0
          %698 = vmatpush1.msra.mxu0 %v651
          %699 = vmatprep.subr.mxu0 0.0
          %700 = vmatpush1.msra.mxu0 %v652
          %701 = vmatprep.subr.mxu0 0.0
          %702 = vmatpush1.msra.mxu0 %v653
          %703 = vmatprep.subr.mxu0 0.0
          %704 = vmatpush1.msra.mxu0 %v654
          %705 = vmatprep.subr.mxu0 0.0
          %706 = vmatpush1.msra.mxu0 %v655
          %707 = vmatprep.subr.mxu0 0.0
          %708 = vmatpush1.msra.mxu0 %v656
          %709 = vmatprep.subr.mxu0 0.0
          %710 = vmatpush1.msra.mxu0 %v657
          %711 = vmatprep.subr.mxu0 0.0
          %712 = vmatpush1.msra.mxu0 %v658
          %713 = vmatprep.subr.mxu0 0.0
          %714 = vmatpush1.msra.mxu0 %v659
          %715 = vmatprep.subr.mxu0 0.0
          %716 = vmatpush1.msra.mxu0 %v660
          %717 = vmatprep.subr.mxu0 0.0
          %718 = vmatpush1.msra.mxu0 %v661
          %719 = vmatprep.subr.mxu0 0.0
          %720 = vmatpush1.msra.mxu0 %v662
          %721 = vmatprep.subr.mxu0 0.0
          %722 = vmatpush1.msra.mxu0 %v663
          %723 = vmatprep.subr.mxu0 0.0
          %724 = vmatpush1.msra.mxu0 %v664
          %725 = vmatprep.subr.mxu0 0.0
          %726 = vmatpush1.msra.mxu0 %v665
          %727 = vmatprep.subr.mxu0 0.0
          %728 = vmatpush1.msra.mxu0 %v666
          %729 = vmatprep.subr.mxu0 0.0
          %730 = vmatpush1.msra.mxu0 %v667
          %731 = vmatprep.subr.mxu0 0.0
          %732 = vmatpush1.msra.mxu0 %v668
          %733 = vmatprep.subr.mxu0 0.0
          %734 = vmatpush1.msra.mxu0 %v669
          %735 = vmatprep.subr.mxu0 0.0
          %736 = vmatpush1.msra.mxu0 %v670
          %737 = vmatprep.subr.mxu0 0.0
          %738 = vmatpush1.msra.mxu0 %v671
          %739 = vmatprep.subr.mxu0 0.0
          %740 = vmatpush1.msra.mxu0 %v672
          %741 = vmatprep.subr.mxu0 0.0
          %742 = vmatpush1.msra.mxu0 %v673
          %743 = vmatprep.subr.mxu0 0.0
          %744 = vmatpush1.msra.mxu0 %v674
          %745 = vmatprep.subr.mxu0 0.0
          %746 = vmatpush1.msra.mxu0 %v675
          %747 = vmatprep.mubr.f32.mxu0 %v629
          %748 = vmatmul.mubr.f32.gmra.mrb[0].mxu0 %v628
          %v749 = vpop.f32.mrb[0].mxu0
          %v750 = vadd.f32 %v681, %v749
          %v751 = vpop.f32.mrb[0].mxu0
          %752 = vmatprep.mubr.f32.mxu0 %v631
          %753 = vmatmul.mubr.f32.gmra.mrb[0].mxu0 %v630
          %v754 = vpop.f32.mrb[0].mxu0
          %v755 = vadd.f32 %v681, %v754
          %v756 = vpop.f32.mrb[0].mxu0
          %757 = vmatprep.mubr.f32.mxu0 %v633
          %758 = vmatmul.mubr.f32.gmra.mrb[0].mxu0 %v632
          %v759 = vpop.f32.mrb[0].mxu0
          %v760 = vadd.f32 %v681, %v759
          %v761 = vpop.f32.mrb[0].mxu0
          %762 = vmatprep.mubr.f32.mxu0 %v635
          %763 = vmatmul.mubr.f32.gmra.mrb[0].mxu0 %v634
          %v764 = vpop.f32.mrb[0].mxu0
          %v765 = vadd.f32 %v681, %v764
          %v766 = vpop.f32.mrb[0].mxu0
          %767 = vmatprep.mubr.f32.mxu0 %v637
          %768 = vmatmul.mubr.f32.gmra.mrb[0].mxu0 %v636
          %v769 = vpop.f32.mrb[0].mxu0
          %v770 = vadd.f32 %v681, %v769
          %v771 = vpop.f32.mrb[0].mxu0
          %772 = vmatprep.mubr.f32.mxu0 %v639
          %773 = vmatmul.mubr.f32.gmra.mrb[0].mxu0 %v638
          %v774 = vpop.f32.mrb[0].mxu0
          %v775 = vadd.f32 %v681, %v774
          %v776 = vpop.f32.mrb[0].mxu0
          %777 = vmatprep.mubr.f32.mxu0 %v641
          %778 = vmatmul.mubr.f32.gmra.mrb[0].mxu0 %v640
          %v779 = vpop.f32.mrb[0].mxu0
          %v780 = vadd.f32 %v681, %v779
          %v781 = vpop.f32.mrb[0].mxu0
          %782 = vmatprep.mubr.f32.mxu0 %v643
          %783 = vmatmul.mubr.f32.gmra.mrb[0].mxu0 %v642
          %v784 = vpop.f32.mrb[0].mxu0
          %v785 = vadd.f32 %v681, %v784
          %v786 = vpop.f32.mrb[0].mxu0
          %787 = vdwg.mxu0
          %v788 = vmax.f32 %v750, 0.0
          %v789 = vmax.f32 %v755, 0.0
          %v790 = vmax.f32 %v760, 0.0
          %v791 = vmax.f32 %v765, 0.0
          %v792 = vmax.f32 %v770, 0.0
          %v793 = vmax.f32 %v775, 0.0
          %v794 = vmax.f32 %v780, 0.0
          %v795 = vmax.f32 %v785, 0.0
          %796 = vst [vmem:[%s350] sm:$0xff] %v788
          %797 = vst [vmem:[%s350 + $0x8] sm:$0xff] %v789
          %798 = vst [vmem:[%s350 + $0x10] sm:$0xff] %v790
          %799 = vst [vmem:[%s350 + $0x18] sm:$0xff] %v791
          %800 = vst [vmem:[%s350 + $0x20] sm:$0xff] %v792
          %801 = vst [vmem:[%s350 + $0x28] sm:$0xff] %v793
          %802 = vst [vmem:[%s350 + $0x30] sm:$0xff] %v794
          %803 = vst [vmem:[%s350 + $0x38] sm:$0xff] %v795
        $region64: #{tpu_custom_call.1} parent=39 // pred_fallthru
          _
        %s804 = sand.u32 %s168, 1
        %s805 = scalar_lea.sflag [#allocation5], %s804
        %s806 = sand.u32 %s168, 1
        %s807 = smul.addr %s806, 64
        %s808 = scalar_lea.vmem [#allocation11], %s807
        // Predicated region
        $region65: #{tpu_custom_call.1} parent=39 // pred_check
          %p809 = pneg %p178
        $region66: #{tpu_custom_call.1} parent=39 // pred_check_branch
          %811 = sbr.rel (%p809) target = $region68
        $region67: #{tpu_custom_call.1} parent=39 // pred_region
          %s812 = smul.u32 8, %s30
          %s814 = ssub.s32 1024, 1024
          %815 = vsyncadd %s805, %s814
          %s816 = smul.addr %s812, 128
          %s817 = scalar_lea.hbm %s5, %s816
          %s818 = sshll.u32 %s808, 4
          %s819 = int_to_ptr.vmem [resolvable:$true] %s818
          %824 = dma.vmem_to_hbm [thread:$0]  %s819, 1024, %s817, %s805, 128, 128, 8
        $region68: #{tpu_custom_call.1} parent=39 // pred_fallthru
          _
      $region40: #{tpu_custom_call.1} parent=5 // pred_fallthru
        _
      %p825 = scmp.le.s32.totalorder 2, %s21
      // Predicated region
      $region69: #{tpu_custom_call.1} parent=5 // pred_check
        %p826 = pneg %p825
      $region70: #{tpu_custom_call.1} parent=5 // pred_check_branch
        %828 = sbr.rel (%p826) target = $region72
      $region71: #{tpu_custom_call.1} parent=5 // pred_region
        %s829 = ssub.s32 %s21, 2
        // Predicated region
        $region73: #{tpu_custom_call.1} parent=71 // pred_check
          %p830 = pneg %p184
        $region74: #{tpu_custom_call.1} parent=71 // pred_check_branch
          %832 = sbr.rel (%p830) target = $region76
        $region75: #{tpu_custom_call.1} parent=71 // pred_region
          %s833 = sand.u32 %s169, 1
          %s834 = scalar_lea.sflag [#allocation5], %s833
          %s835 = sand.u32 %s169, 1
          %s836 = smul.addr %s835, 64
          %s837 = scalar_lea.vmem [#allocation11], %s836
          %838 = dma.done %s834, 1024
        $region76: #{tpu_custom_call.1} parent=71 // pred_fallthru
          _
      $region72: #{tpu_custom_call.1} parent=5 // pred_fallthru
        _
    $region6: #{tpu_custom_call.1} parent=1 // loop_footer
      %s25 = sadd.s32 1, %s21
    $region7: #{tpu_custom_call.1} parent=1 // loop_footer_branch
      %20 = sbr.rel target = $region3
    $region8: #{tpu_custom_call.1} parent=1 // loop_exit
      _
    %839 = vsyncpa [#allocation4], 1
    %s840 = scalar_lea.sflag [#allocation4], 1
    %841 = vsyncpa %s840, 1
    %842 = vsyncpa [#allocation7], 1
    %s843 = scalar_lea.sflag [#allocation7], 1
    %844 = vsyncpa %s843, 1
    %845 = vsyncpa [#allocation10], 1
    %846 = vsyncpa [#allocation5], 1
    %s847 = scalar_lea.sflag [#allocation5], 1
    %848 = vsyncpa %s847, 1

</llo_original>
